<compile_context>
chip_gen: v6e
topology: v6e:2x2x1
jax: 0.10.0
libtpu: 0.0.40
codegen_flags: <defaults>
</compile_context>

<pallas_src>
import jax
import jax.numpy as jnp
from jax.experimental import pallas as pl
from jax.experimental.pallas import tpu as pltpu


def policy_kernel(x_ref, w1_ref, b1_ref, w2_ref, b2_ref, out_ref):
    # Hidden layer: Linear (bf16 MXU inputs, f32 accumulate) + bias + ReLU in f32.
    h = jnp.dot(x_ref[...], w1_ref[...], preferred_element_type=jnp.float32)
    h = jnp.maximum(h + b1_ref[...], 0.0)            # (bm, h_dim) + (1, h_dim)

    # Output layer: Linear. Cast only at the dot input; keep VPU work in f32.
    logits = jnp.dot(h.astype(jnp.bfloat16), w2_ref[...],
                     preferred_element_type=jnp.float32)
    logits = logits + b2_ref[...]                    # (bm, n_act) + (1, n_act)

    # Numerically-stable softmax over dim=1 (action axis), f32 throughout.
    m = jnp.max(logits, axis=-1, keepdims=True)
    e = jnp.exp(logits - m)
    inv = pl.reciprocal(jnp.sum(e, axis=-1, keepdims=True), approx=True)
    out_ref[...] = (e * inv).astype(out_ref.dtype)


def policy_forward(x, w1, b1, w2, b2, *, bm=None):
    B, n_obs = x.shape
    h_dim = w1.shape[1]
    n_act = w2.shape[1]

    # bf16 streaming of the matmul operands; biases stay f32.
    x_bf = x.astype(jnp.bfloat16)
    w1_bf = w1.astype(jnp.bfloat16)
    w2_bf = w2.astype(jnp.bfloat16)

    if bm is None:
        # Per-grid-step overhead (~0.35 us) >> per-tile DMA time here, so run a
        # single step whenever the batch is modest; otherwise use large tiles.
        bm = B if B <= 4096 else 2048

    # Pad the batch so the grid divides evenly; padded rows are sliced off.
    n_blocks = pl.cdiv(B, bm)
    Bp = n_blocks * bm
    if Bp != B:
        x_bf = jnp.pad(x_bf, ((0, Bp - B), (0, 0)))

    out = pl.pallas_call(
        policy_kernel,
        out_shape=jax.ShapeDtypeStruct((Bp, n_act), jnp.float32),
        grid_spec=pl.GridSpec(
            grid=(n_blocks,),
            in_specs=[
                pl.BlockSpec((bm, n_obs), lambda i: (i, 0)),     # x tile (streamed)
                pl.BlockSpec((n_obs, h_dim), lambda i: (0, 0)),  # W1 (resident)
                pl.BlockSpec((1, h_dim), lambda i: (0, 0)),      # b1 (resident)
                pl.BlockSpec((h_dim, n_act), lambda i: (0, 0)),  # W2 (resident)
                pl.BlockSpec((1, n_act), lambda i: (0, 0)),      # b2 (resident)
            ],
            out_specs=pl.BlockSpec((bm, n_act), lambda i: (i, 0)),
        ),
        compiler_params=pltpu.CompilerParams(
            dimension_semantics=("parallel",)),
    )(x_bf, w1_bf, b1, w2_bf, b2)

    return out[:B] if Bp != B else out


def init_params(key, n_observations, h_dim, n_actions):
    # Deterministic init mirroring nn.Linear default: U(-1/sqrt(fan_in), 1/sqrt(fan_in))
    k1, k2, k3, k4 = jax.random.split(key, 4)
    s1 = 1.0 / jnp.sqrt(n_observations)
    s2 = 1.0 / jnp.sqrt(h_dim)
    w1 = jax.random.uniform(k1, (n_observations, h_dim), jnp.float32, -s1, s1)
    b1 = jax.random.uniform(k2, (1, h_dim), jnp.float32, -s1, s1)
    w2 = jax.random.uniform(k3, (h_dim, n_actions), jnp.float32, -s2, s2)
    b2 = jax.random.uniform(k4, (1, n_actions), jnp.float32, -s2, s2)
    return w1, b1, w2, b2


def reference_forward_f32(x, w1, b1, w2, b2):
    # Pure-f32 PyTorch-equivalent forward.
    h = jnp.maximum(x @ w1 + b1, 0.0)
    logits = h @ w2 + b2
    return jax.nn.softmax(logits, axis=1)


def reference_forward_bf16(x, w1, b1, w2, b2):
    # Mirrors the kernel's numerics: bf16 matmul operands, f32 accumulate/epilogue.
    f32 = jnp.float32
    xb = x.astype(jnp.bfloat16).astype(f32)
    w1b = w1.astype(jnp.bfloat16).astype(f32)
    w2b = w2.astype(jnp.bfloat16).astype(f32)
    h = jnp.maximum(xb @ w1b + b1, 0.0)
    logits = h.astype(jnp.bfloat16).astype(f32) @ w2b + b2
    return jax.nn.softmax(logits, axis=1)


if __name__ == "__main__":
    B, n_obs, h_dim, n_act = 8, 16, 32, 4

    key = jax.random.PRNGKey(0)
    kx, kp = jax.random.split(key)
    x = jax.random.normal(kx, (B, n_obs), jnp.float32)
    w1, b1, w2, b2 = init_params(kp, n_obs, h_dim, n_act)

    # Small-batch path: single grid step (bm == B), no padding.
    out = jax.block_until_ready(policy_forward(x, w1, b1, w2, b2))
    assert out.shape == (B, n_act)

    ref_bf16 = reference_forward_bf16(x, w1, b1, w2, b2)
    ref_f32 = reference_forward_f32(x, w1, b1, w2, b2)
    assert jnp.allclose(out, ref_bf16, atol=5e-3, rtol=5e-3)
    assert jnp.allclose(out, ref_f32, atol=2e-2, rtol=2e-2)
    # Softmax rows sum to ~1 (approx reciprocal => ~1e-3 slack).
    assert jnp.allclose(jnp.sum(out, axis=1), jnp.ones((B,)), atol=5e-3)

    # Ragged / tiled path: cdiv grid + caller-side padding (forced small tiles).
    B2 = 1040
    x2 = jax.random.normal(jax.random.PRNGKey(1), (B2, n_obs), jnp.float32)
    out2 = jax.block_until_ready(policy_forward(x2, w1, b1, w2, b2, bm=256))
    assert out2.shape == (B2, n_act)
    ref2 = reference_forward_bf16(x2, w1, b1, w2, b2)
    assert jnp.allclose(out2, ref2, atol=5e-3, rtol=5e-3)
    assert jnp.allclose(jnp.sum(out2, axis=1), jnp.ones((B2,)), atol=5e-3)

    # Default tiling for the same batch (single step since B2 <= 4096).
    out3 = jax.block_until_ready(policy_forward(x2, w1, b1, w2, b2))
    assert jnp.allclose(out3, ref2, atol=5e-3, rtol=5e-3)

    print("KERNEL_OK")
</pallas_src>

<mosaic_0001>
module attributes {stable_mosaic.version = 11 : i64} {
  func.func @policy_kernel(%arg0: i32, %arg1: memref<8x16xbf16, #tpu.memory_space<vmem>>, %arg2: memref<16x32xbf16, #tpu.memory_space<vmem>>, %arg3: memref<1x32xf32, #tpu.memory_space<vmem>>, %arg4: memref<32x4xbf16, #tpu.memory_space<vmem>>, %arg5: memref<1x4xf32, #tpu.memory_space<vmem>>, %arg6: memref<8x4xf32, #tpu.memory_space<vmem>>) attributes {dimension_semantics = [#tpu.dimension_semantics<parallel>], iteration_bounds = array<i64: 1>, scalar_prefetch = 0 : i64, scratch_operands = 0 : i64, tpu.core_type = #tpu.core_type<tc>, window_params = [{transform_indices = @transform_0, window_bounds = array<i64: 8, 16>}, {pipeline_mode = #tpu.pipeline_mode<synchronous>, transform_indices = @transform_1, window_bounds = array<i64: 16, 32>}, {pipeline_mode = #tpu.pipeline_mode<synchronous>, transform_indices = @transform_2, window_bounds = array<i64: 1, 32>}, {pipeline_mode = #tpu.pipeline_mode<synchronous>, transform_indices = @transform_3, window_bounds = array<i64: 32, 4>}, {pipeline_mode = #tpu.pipeline_mode<synchronous>, transform_indices = @transform_4, window_bounds = array<i64: 1, 4>}, {transform_indices = @transform_5, window_bounds = array<i64: 8, 4>}]} {
    %c0 = arith.constant 0 : index
    %c0_0 = arith.constant 0 : index
    %0 = vector.load %arg1[%c0, %c0_0] : memref<8x16xbf16, #tpu.memory_space<vmem>>, vector<8x16xbf16>
    %c0_1 = arith.constant 0 : index
    %c0_2 = arith.constant 0 : index
    %1 = vector.load %arg2[%c0_1, %c0_2] : memref<16x32xbf16, #tpu.memory_space<vmem>>, vector<16x32xbf16>
    %cst = arith.constant dense<0.000000e+00> : vector<8x32xf32>
    %2 = tpu.matmul %0, %1, %cst {dimension_numbers = #tpu.dot_dimension_numbers<[1], [0], [0], [1], [0, 0, 1, 1], [], []>} : vector<8x16xbf16>, vector<16x32xbf16>, vector<8x32xf32> -> vector<8x32xf32>
    %c0_3 = arith.constant 0 : index
    %c0_4 = arith.constant 0 : index
    %3 = vector.load %arg3[%c0_3, %c0_4] : memref<1x32xf32, #tpu.memory_space<vmem>>, vector<1x32xf32>
    %4 = vector.broadcast %3 : vector<1x32xf32> to vector<8x32xf32>
    %5 = arith.addf %2, %4 : vector<8x32xf32>
    %cst_5 = arith.constant 0.000000e+00 : f32
    %6 = vector.broadcast %cst_5 : f32 to vector<8x32xf32>
    %7 = arith.maximumf %5, %6 : vector<8x32xf32>
    %8 = arith.truncf %7 : vector<8x32xf32> to vector<8x32xbf16>
    %c0_6 = arith.constant 0 : index
    %c0_7 = arith.constant 0 : index
    %9 = vector.load %arg4[%c0_6, %c0_7] : memref<32x4xbf16, #tpu.memory_space<vmem>>, vector<32x4xbf16>
    %cst_8 = arith.constant dense<0.000000e+00> : vector<8x4xf32>
    %10 = tpu.matmul %8, %9, %cst_8 {dimension_numbers = #tpu.dot_dimension_numbers<[1], [0], [0], [1], [0, 0, 1, 1], [], []>} : vector<8x32xbf16>, vector<32x4xbf16>, vector<8x4xf32> -> vector<8x4xf32>
    %c0_9 = arith.constant 0 : index
    %c0_10 = arith.constant 0 : index
    %11 = vector.load %arg5[%c0_9, %c0_10] : memref<1x4xf32, #tpu.memory_space<vmem>>, vector<1x4xf32>
    %12 = vector.broadcast %11 : vector<1x4xf32> to vector<8x4xf32>
    %13 = arith.addf %10, %12 : vector<8x4xf32>
    %cst_11 = arith.constant dense<0xFF800000> : vector<8xf32>
    %14 = vector.multi_reduction <maximumf>, %13, %cst_11 [1] : vector<8x4xf32> to vector<8xf32>
    %15 = vector.shape_cast %14 : vector<8xf32> to vector<8x1xf32>
    %16 = vector.broadcast %15 : vector<8x1xf32> to vector<8x4xf32>
    %17 = arith.subf %13, %16 : vector<8x4xf32>
    %18 = math.exp %17 : vector<8x4xf32>
    %cst_12 = arith.constant dense<0.000000e+00> : vector<8xf32>
    %19 = vector.multi_reduction <add>, %18, %cst_12 [1] : vector<8x4xf32> to vector<8xf32>
    %20 = vector.shape_cast %19 : vector<8xf32> to vector<8x1xf32>
    %21 = tpu.reciprocal %20 {approx = true} : vector<8x1xf32> -> vector<8x1xf32>
    %22 = vector.broadcast %21 : vector<8x1xf32> to vector<8x4xf32>
    %23 = arith.mulf %18, %22 : vector<8x4xf32>
    %c0_13 = arith.constant 0 : index
    %c0_14 = arith.constant 0 : index
    %24 = vector.load %arg6[%c0_13, %c0_14] : memref<8x4xf32, #tpu.memory_space<vmem>>, vector<8x4xf32>
    tpu.vector_store %arg6[%c0_13, %c0_14], %23 {strides = array<i32>} : memref<8x4xf32, #tpu.memory_space<vmem>>, vector<8x4xf32>,
    return
  }
  func.func @transform_0(%arg0: i32) -> (i32, i32) {
    %c0_i32 = arith.constant 0 : i32
    %c0_i32_0 = arith.constant 0 : i32
    return %arg0, %c0_i32 : i32, i32
  }
  func.func @transform_1(%arg0: i32) -> (i32, i32) {
    %c0_i32 = arith.constant 0 : i32
    %c0_i32_0 = arith.constant 0 : i32
    %c0_i32_1 = arith.constant 0 : i32
    return %c0_i32, %c0_i32_0 : i32, i32
  }
  func.func @transform_2(%arg0: i32) -> (i32, i32) {
    %c0_i32 = arith.constant 0 : i32
    %c0_i32_0 = arith.constant 0 : i32
    %c0_i32_1 = arith.constant 0 : i32
    return %c0_i32, %c0_i32_0 : i32, i32
  }
  func.func @transform_3(%arg0: i32) -> (i32, i32) {
    %c0_i32 = arith.constant 0 : i32
    %c0_i32_0 = arith.constant 0 : i32
    %c0_i32_1 = arith.constant 0 : i32
    return %c0_i32, %c0_i32_0 : i32, i32
  }
  func.func @transform_4(%arg0: i32) -> (i32, i32) {
    %c0_i32 = arith.constant 0 : i32
    %c0_i32_0 = arith.constant 0 : i32
    %c0_i32_1 = arith.constant 0 : i32
    return %c0_i32, %c0_i32_0 : i32, i32
  }
  func.func @transform_5(%arg0: i32) -> (i32, i32) {
    %c0_i32 = arith.constant 0 : i32
    %c0_i32_0 = arith.constant 0 : i32
    return %arg0, %c0_i32 : i32, i32
  }
}

</mosaic_0001>

<llo_original>
// kernel: tpu_custom_call.1
$region0: #{tpu_custom_call.1}
  #allocation0 [shape = 'u32[]', space=smem, size = 0x4, offset = 0x4, fixed_abs, tag = 'smem constant byte address 0x4 - core index']
  #allocation1 [shape = 'u32[144,128]{1,0:T(1,128)}', space=vmem, size = 0x12000, scoped, tag = 'internal scratch']
  %s0 = inlined_call_operand.vmem [shape: bf16[8,16], index: 0, kind: input, shape index: {}]
  %s1 = inlined_call_operand.vmem [shape: bf16[16,32], index: 1, kind: input, shape index: {}]
  %s2 = inlined_call_operand.vmem [shape: f32[1,32], index: 2, kind: input, shape index: {}]
  %s3 = inlined_call_operand.vmem [shape: bf16[32,4], index: 3, kind: input, shape index: {}]
  %s4 = inlined_call_operand.vmem [shape: f32[1,4], index: 4, kind: input, shape index: {}]
  %s5 = inlined_call_operand.vmem [shape: f32[8,4], index: 5, kind: output, shape index: {}]
  %s6 = sld [smem:[#allocation0]]
  $region30: #{tpu_custom_call.1} parent=0
    _
  %s8 = ssub.s32 1, %s6
  %s9 = scalar_select 0, %s8, %s6
  // Predicated region
  $region2: #{tpu_custom_call.1} parent=0 // pred_check
    _
  $region3: #{tpu_custom_call.1} parent=0 // pred_check_branch
    %11 = sbr.rel (0) target = $region5
  $region4: #{tpu_custom_call.1} parent=0 // pred_region
    _
  $region5: #{tpu_custom_call.1} parent=0 // pred_fallthru
    _
  // Predicated region
  $region6: #{tpu_custom_call.1} parent=0 // pred_check
    _
  $region7: #{tpu_custom_call.1} parent=0 // pred_check_branch
    %13 = sbr.rel (0) target = $region9
  $region8: #{tpu_custom_call.1} parent=0 // pred_region
    _
  $region9: #{tpu_custom_call.1} parent=0 // pred_fallthru
    _
  // Predicated region
  $region10: #{tpu_custom_call.1} parent=0 // pred_check
    _
  $region11: #{tpu_custom_call.1} parent=0 // pred_check_branch
    %15 = sbr.rel (0) target = $region13
  $region12: #{tpu_custom_call.1} parent=0 // pred_region
    _
  $region13: #{tpu_custom_call.1} parent=0 // pred_fallthru
    _
  // Predicated region
  $region14: #{tpu_custom_call.1} parent=0 // pred_check
    _
  $region15: #{tpu_custom_call.1} parent=0 // pred_check_branch
    %17 = sbr.rel (0) target = $region17
  $region16: #{tpu_custom_call.1} parent=0 // pred_region
    _
  $region17: #{tpu_custom_call.1} parent=0 // pred_fallthru
    _
  // Predicated region
  $region18: #{tpu_custom_call.1} parent=0 // pred_check
    _
  $region19: #{tpu_custom_call.1} parent=0 // pred_check_branch
    %19 = sbr.rel (0) target = $region21
  $region20: #{tpu_custom_call.1} parent=0 // pred_region
    _
  $region21: #{tpu_custom_call.1} parent=0 // pred_fallthru
    _
  %v21 = vld [vmem:[%s0] sm:$0xf]
  %v22 = vld [vmem:[%s1] sm:$0xf]
  %v23 = vld [vmem:[%s1 + $0x4] sm:$0xf]
  %v24 = vld [vmem:[%s2] sm:$0x1]
  %v26 = vlaneseq
  %v27 = vshrl.u32 %v26, 7
  %v28 = vsub.s32 0, %v27
  %v29 = vrot.slane %v24, %v28
  %v33 = vunpack.c.l.b16 %v22
  %v34 = vunpack.c.l.b16 %v23
  %v35 = vpack.c.b16 %v34, %v33
  %vm37 = vcmask 130048
  %v39 = vsel %vm37, %v21, 0
  %41 = vmatprep.subr.bf16.mxu0 0
  %42 = vmatpush1.bf16.msra.mxu0 0
  %43 = vmatprep.subr.bf16.mxu0 0
  %44 = vmatpush1.bf16.msra.mxu0 0
  %45 = vmatprep.subr.bf16.mxu0 0
  %46 = vmatpush1.bf16.msra.mxu0 0
  %47 = vmatprep.subr.bf16.mxu0 0
  %48 = vmatpush1.bf16.msra.mxu0 0
  %49 = vmatprep.subr.bf16.mxu0 0
  %50 = vmatpush1.bf16.msra.mxu0 0
  %51 = vmatprep.subr.bf16.mxu0 0
  %52 = vmatpush1.bf16.msra.mxu0 0
  %53 = vmatprep.subr.bf16.mxu0 0
  %54 = vmatpush1.bf16.msra.mxu0 0
  %55 = vmatprep.subr.bf16.mxu0 0
  %56 = vmatpush1.bf16.msra.mxu0 %v35
  %57 = vmatprep.subr.bf16.mxu0 0
  %58 = vmatpush2.bf16.msra.mxu0 0
  %59 = vmatprep.subr.bf16.mxu0 0
  %60 = vmatpush2.bf16.msra.mxu0 0
  %61 = vmatprep.subr.bf16.mxu0 0
  %62 = vmatpush2.bf16.msra.mxu0 0
  %63 = vmatprep.subr.bf16.mxu0 0
  %64 = vmatpush2.bf16.msra.mxu0 0
  %65 = vmatprep.subr.bf16.mxu0 0
  %66 = vmatpush2.bf16.msra.mxu0 0
  %67 = vmatprep.subr.bf16.mxu0 0
  %68 = vmatpush2.bf16.msra.mxu0 0
  %69 = vmatprep.subr.bf16.mxu0 0
  %70 = vmatpush2.bf16.msra.mxu0 0
  %71 = vmatprep.subr.bf16.mxu0 0
  %72 = vmatpush2.bf16.msra.mxu0 0
  %73 = vmatprep.mubr.bf16.mxu0 0
  %74 = vmatmul.mubr.bf16.gmra.mxu0 %v39
  %v75 = vpop.f32.mrf.mxu0
  %v76 = vadd.f32 %v29, %v75
  %v77 = vpop.f32.mrf.mxu0
  %v78 = vpop.f32.mrf.mxu0
  %v79 = vpop.f32.mrf.mxu0
  %80 = vdwg.mxu0
  %v81 = vmax.f32 %v76, 0.0
  %v82 = vpack.c.bf16 %v81, %v81
  %v83 = vld [vmem:[%s3] sm:$0xf]
  %v84 = vld [vmem:[%s3 + $0x4] sm:$0xf]
  %v85 = vld [vmem:[%s3 + $0x8] sm:$0xf]
  %v86 = vld [vmem:[%s3 + $0xc] sm:$0xf]
  %v87 = vld [vmem:[%s4] sm:$0x1]
  %v89 = vlaneseq
  %v90 = vshrl.u32 %v89, 7
  %v91 = vsub.s32 0, %v90
  %v92 = vrot.slane %v87, %v91
  %v98 = vunpack.c.l.b16 %v83
  %v99 = vunpack.c.l.b16 %v84
  %v100 = vunpack.c.l.b16 %v85
  %v101 = vunpack.c.l.b16 %v86
  %v102 = vpack.c.b16 %v99, %v98
  %v103 = vpack.c.b16 %v101, %v100
  %vm106 = vcmask 261120
  %v108 = vsel %vm106, %v82, 0
  %110 = vmatprep.subr.bf16.mxu0 0
  %111 = vmatpush1.bf16.msra.mxu0 0
  %112 = vmatprep.subr.bf16.mxu0 0
  %113 = vmatpush1.bf16.msra.mxu0 0
  %114 = vmatprep.subr.bf16.mxu0 0
  %115 = vmatpush1.bf16.msra.mxu0 0
  %116 = vmatprep.subr.bf16.mxu0 0
  %117 = vmatpush1.bf16.msra.mxu0 0
  %118 = vmatprep.subr.bf16.mxu0 0
  %119 = vmatpush1.bf16.msra.mxu0 0
  %120 = vmatprep.subr.bf16.mxu0 0
  %121 = vmatpush1.bf16.msra.mxu0 0
  %122 = vmatprep.subr.bf16.mxu0 0
  %123 = vmatpush1.bf16.msra.mxu0 %v103
  %124 = vmatprep.subr.bf16.mxu0 0
  %125 = vmatpush1.bf16.msra.mxu0 %v102
  %126 = vmatprep.subr.bf16.mxu0 0
  %127 = vmatpush2.bf16.msra.mxu0 0
  %128 = vmatprep.subr.bf16.mxu0 0
  %129 = vmatpush2.bf16.msra.mxu0 0
  %130 = vmatprep.subr.bf16.mxu0 0
  %131 = vmatpush2.bf16.msra.mxu0 0
  %132 = vmatprep.subr.bf16.mxu0 0
  %133 = vmatpush2.bf16.msra.mxu0 0
  %134 = vmatprep.subr.bf16.mxu0 0
  %135 = vmatpush2.bf16.msra.mxu0 0
  %136 = vmatprep.subr.bf16.mxu0 0
  %137 = vmatpush2.bf16.msra.mxu0 0
  %138 = vmatprep.subr.bf16.mxu0 0
  %139 = vmatpush2.bf16.msra.mxu0 0
  %140 = vmatprep.subr.bf16.mxu0 0
  %141 = vmatpush2.bf16.msra.mxu0 0
  %142 = vmatprep.mubr.bf16.mxu0 0
  %143 = vmatmul.mubr.bf16.gmra.mxu0 %v108
  %v144 = vpop.f32.mrf.mxu0
  %v145 = vadd.f32 %v92, %v144
  %v146 = vpop.f32.mrf.mxu0
  %v147 = vpop.f32.mrf.mxu0
  %v148 = vpop.f32.mrf.mxu0
  %149 = vdwg.mxu0
  %vm150 = vcmask 31744
  %v151 = vsel %vm150, %v145, -inf
  %152 = vmax.xlane.f32.xlu0 %v151
  %v153 = vpop.xlane.xlu0 %152
  %v154 = vsub.f32 %v145, %v153
  %v155 = vmul.f32 %v154, 1.442695
  %v156 = vpow.pop %v155
  %v157 = vsel %vm150, %v156, 0.0
  %158 = vadd.xlane.f32.xlu0 %v157
  %v159 = vpop.xlane.xlu0 %158
  %v160 = vrcp.pop %v159
  %v161 = vmul.f32 %v156, %v160
  %162 = vst.msk [vmem:[%s5] sm:$0xff] %vm150, %v161
  // Predicated region
  $region22: #{tpu_custom_call.1} parent=0 // pred_check
    _
  $region23: #{tpu_custom_call.1} parent=0 // pred_check_branch
    %164 = sbr.rel (0) target = $region25
  $region24: #{tpu_custom_call.1} parent=0 // pred_region
    _
  $region25: #{tpu_custom_call.1} parent=0 // pred_fallthru
    _
  // Predicated region
  $region26: #{tpu_custom_call.1} parent=0 // pred_check
    _
  $region27: #{tpu_custom_call.1} parent=0 // pred_check_branch
    %166 = sbr.rel (0) target = $region29
  $region28: #{tpu_custom_call.1} parent=0 // pred_region
    _
  $region29: #{tpu_custom_call.1} parent=0 // pred_fallthru
    _

</llo_original>
